<compile_context>
chip_gen: v7x
topology: tpu7x:2x2x1
jax: 0.10.0
libtpu: 0.0.40
codegen_flags: <defaults>
</compile_context>

<pallas_src>
import functools

import jax
import jax.numpy as jnp
from jax.experimental import pallas as pl
from jax.experimental.pallas import tpu as pltpu


def _round_up(x, m):
    return ((x + m - 1) // m) * m


def _conv_relu_kernel_fused(x_ref, w_ref, b_ref, o_ref, slab_ref, *,
                            taps, c, tl, lane_tiles):
    # x_ref:    (1, C, Lin)   zero-padded, spatially flattened image (bf16)
    # w_ref:    (TOC, K)      K = KH*KW*C, weights reshaped for one big dot
    # b_ref:    (TOC, 1)      f32 bias
    # o_ref:    (1, TOC, TL)  lane axis = flattened stride-1 output pixels
    # slab_ref: (K, TL)       im2col slab for the current lane tile (scratch)
    if lane_tiles == 1:
        base = 0                                   # fully static slices
    else:
        base = pl.multiple_of(pl.program_id(2) * tl, tl)
    for k, d in enumerate(taps):                   # statically unrolled
        slab_ref[k * c:(k + 1) * c, :] = x_ref[0, :, pl.ds(base + d, tl)]
    acc = jnp.dot(w_ref[...], slab_ref[...], preferred_element_type=jnp.float32)
    acc = acc + b_ref[...]                         # (TOC,1) broadcast on lanes
    o_ref[0] = jnp.maximum(acc, 0.0).astype(o_ref.dtype)


def _conv_relu_kernel_tapdots(x_ref, w_ref, b_ref, o_ref, *,
                              taps, tl, lane_tiles):
    # Per-tap dot path, used when C already fills the MXU contraction depth.
    # w_ref: (KH*KW, TOC, C)
    if lane_tiles == 1:
        base = 0
    else:
        base = pl.multiple_of(pl.program_id(2) * tl, tl)
    toc = w_ref.shape[1]
    acc = jnp.zeros((toc, tl), dtype=jnp.float32)
    for k, d in enumerate(taps):
        xs = x_ref[0, :, pl.ds(base + d, tl)]      # (C, TL)
        acc = acc + jnp.dot(w_ref[k], xs, preferred_element_type=jnp.float32)
    acc = acc + b_ref[...]
    o_ref[0] = jnp.maximum(acc, 0.0).astype(o_ref.dtype)


def basic_conv(x, weight, bias, *, stride=1, padding=0):
    """F.relu(conv2d(x, weight, bias, stride, padding)); NCHW in / NCHW out."""
    N, C, H, W = x.shape
    OC, C_w, KH, KW = weight.shape
    assert C == C_w
    sh, sw = (stride, stride) if isinstance(stride, int) else stride
    ph, pw = (padding, padding) if isinstance(padding, int) else padding

    Hp, Wp = H + 2 * ph, W + 2 * pw
    OH1, OW1 = Hp - KH + 1, Wp - KW + 1            # stride-1 output extent
    OH, OW = (Hp - KH) // sh + 1, (Wp - KW) // sw + 1

    # All stride-1 outputs live at flattened index oh*Wp + ow; lanes beyond
    # OW1 per row ("gutter") are garbage and sliced off in the wrapper.
    L_need = OH1 * Wp
    fuse = C < 128                                 # merge taps into one K-dot?
    TL_cap = 512 if fuse else 256                  # keeps per-tap acc <=128 KiB
    TL = min(TL_cap, _round_up(L_need, 128))       # lane tile (mult. of 128)
    Lt = _round_up(L_need, TL)
    d_max = (KH - 1) * Wp + (KW - 1)

    # Single pad pass: spatial zero-pad + enough extra bottom rows so every
    # (base + tap) slice of length TL stays in-bounds.
    extra = max(0, d_max + Lt - Hp * Wp)
    er = -(-extra // Wp)                           # ceil div (0 if extra == 0)
    Lin = (Hp + er) * Wp
    xp = jnp.pad(x, ((0, 0), (0, 0), (ph, ph + er), (pw, pw)))
    xf = xp.reshape(N, C, Lin).astype(jnp.bfloat16)

    TOC = 128 if OC > 128 else _round_up(OC, 8)
    OCp = _round_up(OC, TOC)
    K = KH * KW * C
    taps = tuple(kh * Wp + kw for kh in range(KH) for kw in range(KW))

    b2 = jnp.pad(bias.astype(jnp.float32), (0, OCp - OC)).reshape(OCp, 1)

    grid = (N, OCp // TOC, Lt // TL)
    lane_tiles = Lt // TL
    x_spec = pl.BlockSpec((1, C, Lin), lambda n, o, l: (n, 0, 0))
    b_spec = pl.BlockSpec((TOC, 1), lambda n, o, l: (o, 0))
    out_spec = pl.BlockSpec((1, TOC, TL), lambda n, o, l: (n, o, l))

    if fuse:
        # wk[oc, (kh*KW + kw)*C + c] = weight[oc, c, kh, kw]
        wk = weight.transpose(0, 2, 3, 1).reshape(OC, K)
        wk = jnp.pad(wk, ((0, OCp - OC), (0, 0))).astype(jnp.bfloat16)
        w_spec = pl.BlockSpec((TOC, K), lambda n, o, l: (o, 0))
        kernel = functools.partial(_conv_relu_kernel_fused,
                                   taps=taps, c=C, tl=TL, lane_tiles=lane_tiles)
        scratch = [pltpu.VMEM((K, TL), jnp.bfloat16)]
    else:
        wk = weight.transpose(2, 3, 0, 1).reshape(KH * KW, OC, C)
        wk = jnp.pad(wk, ((0, 0), (0, OCp - OC), (0, 0))).astype(jnp.bfloat16)
        w_spec = pl.BlockSpec((KH * KW, TOC, C), lambda n, o, l: (0, o, 0))
        kernel = functools.partial(_conv_relu_kernel_tapdots,
                                   taps=taps, tl=TL, lane_tiles=lane_tiles)
        scratch = []

    cost = pl.CostEstimate(
        flops=2 * N * OC * K * OH1 * OW1,
        transcendentals=0,
        bytes_accessed=int(xf.size) * 2 + int(wk.size) * 2
        + N * OCp * Lt * x.dtype.itemsize + OCp * 4,
    )

    out = pl.pallas_call(
        kernel,
        out_shape=jax.ShapeDtypeStruct((N, OCp, Lt), x.dtype),
        grid_spec=pltpu.PrefetchScalarGridSpec(
            num_scalar_prefetch=0,
            grid=grid,
            in_specs=[x_spec, w_spec, b_spec],
            out_specs=out_spec,
            scratch_shapes=scratch,
        ),
        compiler_params=pltpu.CompilerParams(
            dimension_semantics=("parallel", "parallel", "parallel"),
            vmem_limit_bytes=32 * 1024 * 1024,
        ),
        cost_estimate=cost,
    )(xf, wk, b2)

    # [N, OCp, Lt] -> NCHW: drop padded channels and gutter lanes.
    y = out[:, :OC, :L_need].reshape(N, OC, OH1, Wp)[:, :, :, :OW1]
    if sh != 1 or sw != 1:
        # TODO(synk): fold stride into the kernel's lane indexing instead of
        # computing the stride-1 conv and subsampling here.
        y = y[:, :, ::sh, ::sw][:, :, :OH, :OW]
    return y


if __name__ == "__main__":
    key = jax.random.PRNGKey(0)
    k_x, k_w, k_b = jax.random.split(key, 3)

    # BasicConv(input_channels=4, output_channels=8, kernel_size=3, padding=1)
    N, C, H, W = 2, 4, 16, 16
    OC, KH, KW = 8, 3, 3

    x = jax.random.normal(k_x, (N, C, H, W), dtype=jnp.float32)
    weight = jax.random.normal(k_w, (OC, C, KH, KW), dtype=jnp.float32) * 0.1
    bias = jax.random.normal(k_b, (OC,), dtype=jnp.float32) * 0.1

    out = basic_conv(x, weight, bias, stride=1, padding=1)
    out = jax.block_until_ready(out)

    # Reference: F.relu(conv2d(x, weight, bias, stride=1, padding=1)) in f32.
    ref = jax.lax.conv_general_dilated(
        x, weight, window_strides=(1, 1), padding=((1, 1), (1, 1)),
        dimension_numbers=("NCHW", "OIHW", "NCHW"),
    ) + bias.reshape(1, OC, 1, 1)
    ref = jnp.maximum(ref, 0.0)

    assert out.shape == (N, OC, H, W)
    # bf16 MXU operands with f32 accumulation -> loosened tolerance.
    assert jnp.allclose(out, ref, atol=2e-2, rtol=2e-2), \
        float(jnp.max(jnp.abs(out - ref)))
    print("KERNEL_OK")
</pallas_src>

<mosaic_0001>
module attributes {stable_mosaic.version = 11 : i64} {
  func.func @_conv_relu_kernel_fused(%arg0: i32, %arg1: i32, %arg2: i32, %arg3: memref<1x4x432xbf16, #tpu.memory_space<vmem>>, %arg4: memref<8x36xbf16, #tpu.memory_space<vmem>>, %arg5: memref<8x1xf32, #tpu.memory_space<vmem>>, %arg6: memref<1x8x384xf32, #tpu.memory_space<vmem>>, %arg7: memref<36x384xbf16, #tpu.memory_space<vmem>>) attributes {dimension_semantics = [#tpu.dimension_semantics<parallel>, #tpu.dimension_semantics<parallel>, #tpu.dimension_semantics<parallel>], iteration_bounds = array<i64: 2, 1, 1>, scalar_prefetch = 0 : i64, scratch_operands = 1 : i64, tpu.core_type = #tpu.core_type<tc>, window_params = [{transform_indices = @transform_0, window_bounds = array<i64: 1, 4, 432>}, {transform_indices = @transform_1, window_bounds = array<i64: 8, 36>}, {transform_indices = @transform_2, window_bounds = array<i64: 8, 1>}, {transform_indices = @transform_3, window_bounds = array<i64: 1, 8, 384>}]} {
    %c0 = arith.constant 0 : index
    %c0_0 = arith.constant 0 : index
    %c0_1 = arith.constant 0 : index
    %0 = vector.load %arg3[%c0, %c0_0, %c0_1] : memref<1x4x432xbf16, #tpu.memory_space<vmem>>, vector<1x4x384xbf16>
    %1 = vector.shape_cast %0 : vector<1x4x384xbf16> to vector<4x384xbf16>
    %c0_2 = arith.constant 0 : index
    %c0_3 = arith.constant 0 : index
    %2 = vector.load %arg7[%c0_2, %c0_3] : memref<36x384xbf16, #tpu.memory_space<vmem>>, vector<4x384xbf16>
    tpu.vector_store %arg7[%c0_2, %c0_3], %1 {strides = array<i32>} : memref<36x384xbf16, #tpu.memory_space<vmem>>, vector<4x384xbf16>,
    %c0_4 = arith.constant 0 : index
    %c0_5 = arith.constant 0 : index
    %c1 = arith.constant 1 : index
    %3 = vector.load %arg3[%c0_4, %c0_5, %c1] : memref<1x4x432xbf16, #tpu.memory_space<vmem>>, vector<1x4x384xbf16>
    %4 = vector.shape_cast %3 : vector<1x4x384xbf16> to vector<4x384xbf16>
    %c4 = arith.constant 4 : index
    %c0_6 = arith.constant 0 : index
    %5 = vector.load %arg7[%c4, %c0_6] : memref<36x384xbf16, #tpu.memory_space<vmem>>, vector<4x384xbf16>
    tpu.vector_store %arg7[%c4, %c0_6], %4 {strides = array<i32>} : memref<36x384xbf16, #tpu.memory_space<vmem>>, vector<4x384xbf16>,
    %c0_7 = arith.constant 0 : index
    %c0_8 = arith.constant 0 : index
    %c2 = arith.constant 2 : index
    %6 = vector.load %arg3[%c0_7, %c0_8, %c2] : memref<1x4x432xbf16, #tpu.memory_space<vmem>>, vector<1x4x384xbf16>
    %7 = vector.shape_cast %6 : vector<1x4x384xbf16> to vector<4x384xbf16>
    %c8 = arith.constant 8 : index
    %c0_9 = arith.constant 0 : index
    %8 = vector.load %arg7[%c8, %c0_9] : memref<36x384xbf16, #tpu.memory_space<vmem>>, vector<4x384xbf16>
    tpu.vector_store %arg7[%c8, %c0_9], %7 {strides = array<i32>} : memref<36x384xbf16, #tpu.memory_space<vmem>>, vector<4x384xbf16>,
    %c0_10 = arith.constant 0 : index
    %c0_11 = arith.constant 0 : index
    %c18 = arith.constant 18 : index
    %9 = vector.load %arg3[%c0_10, %c0_11, %c18] : memref<1x4x432xbf16, #tpu.memory_space<vmem>>, vector<1x4x384xbf16>
    %10 = vector.shape_cast %9 : vector<1x4x384xbf16> to vector<4x384xbf16>
    %c12 = arith.constant 12 : index
    %c0_12 = arith.constant 0 : index
    %11 = vector.load %arg7[%c12, %c0_12] : memref<36x384xbf16, #tpu.memory_space<vmem>>, vector<4x384xbf16>
    tpu.vector_store %arg7[%c12, %c0_12], %10 {strides = array<i32>} : memref<36x384xbf16, #tpu.memory_space<vmem>>, vector<4x384xbf16>,
    %c0_13 = arith.constant 0 : index
    %c0_14 = arith.constant 0 : index
    %c19 = arith.constant 19 : index
    %12 = vector.load %arg3[%c0_13, %c0_14, %c19] : memref<1x4x432xbf16, #tpu.memory_space<vmem>>, vector<1x4x384xbf16>
    %13 = vector.shape_cast %12 : vector<1x4x384xbf16> to vector<4x384xbf16>
    %c16 = arith.constant 16 : index
    %c0_15 = arith.constant 0 : index
    %14 = vector.load %arg7[%c16, %c0_15] : memref<36x384xbf16, #tpu.memory_space<vmem>>, vector<4x384xbf16>
    tpu.vector_store %arg7[%c16, %c0_15], %13 {strides = array<i32>} : memref<36x384xbf16, #tpu.memory_space<vmem>>, vector<4x384xbf16>,
    %c0_16 = arith.constant 0 : index
    %c0_17 = arith.constant 0 : index
    %c20 = arith.constant 20 : index
    %15 = vector.load %arg3[%c0_16, %c0_17, %c20] : memref<1x4x432xbf16, #tpu.memory_space<vmem>>, vector<1x4x384xbf16>
    %16 = vector.shape_cast %15 : vector<1x4x384xbf16> to vector<4x384xbf16>
    %c20_18 = arith.constant 20 : index
    %c0_19 = arith.constant 0 : index
    %17 = vector.load %arg7[%c20_18, %c0_19] : memref<36x384xbf16, #tpu.memory_space<vmem>>, vector<4x384xbf16>
    tpu.vector_store %arg7[%c20_18, %c0_19], %16 {strides = array<i32>} : memref<36x384xbf16, #tpu.memory_space<vmem>>, vector<4x384xbf16>,
    %c0_20 = arith.constant 0 : index
    %c0_21 = arith.constant 0 : index
    %c36 = arith.constant 36 : index
    %18 = vector.load %arg3[%c0_20, %c0_21, %c36] : memref<1x4x432xbf16, #tpu.memory_space<vmem>>, vector<1x4x384xbf16>
    %19 = vector.shape_cast %18 : vector<1x4x384xbf16> to vector<4x384xbf16>
    %c24 = arith.constant 24 : index
    %c0_22 = arith.constant 0 : index
    %20 = vector.load %arg7[%c24, %c0_22] : memref<36x384xbf16, #tpu.memory_space<vmem>>, vector<4x384xbf16>
    tpu.vector_store %arg7[%c24, %c0_22], %19 {strides = array<i32>} : memref<36x384xbf16, #tpu.memory_space<vmem>>, vector<4x384xbf16>,
    %c0_23 = arith.constant 0 : index
    %c0_24 = arith.constant 0 : index
    %c37 = arith.constant 37 : index
    %21 = vector.load %arg3[%c0_23, %c0_24, %c37] : memref<1x4x432xbf16, #tpu.memory_space<vmem>>, vector<1x4x384xbf16>
    %22 = vector.shape_cast %21 : vector<1x4x384xbf16> to vector<4x384xbf16>
    %c28 = arith.constant 28 : index
    %c0_25 = arith.constant 0 : index
    %23 = vector.load %arg7[%c28, %c0_25] : memref<36x384xbf16, #tpu.memory_space<vmem>>, vector<4x384xbf16>
    tpu.vector_store %arg7[%c28, %c0_25], %22 {strides = array<i32>} : memref<36x384xbf16, #tpu.memory_space<vmem>>, vector<4x384xbf16>,
    %c0_26 = arith.constant 0 : index
    %c0_27 = arith.constant 0 : index
    %c38 = arith.constant 38 : index
    %24 = vector.load %arg3[%c0_26, %c0_27, %c38] : memref<1x4x432xbf16, #tpu.memory_space<vmem>>, vector<1x4x384xbf16>
    %25 = vector.shape_cast %24 : vector<1x4x384xbf16> to vector<4x384xbf16>
    %c32 = arith.constant 32 : index
    %c0_28 = arith.constant 0 : index
    %26 = vector.load %arg7[%c32, %c0_28] : memref<36x384xbf16, #tpu.memory_space<vmem>>, vector<4x384xbf16>
    tpu.vector_store %arg7[%c32, %c0_28], %25 {strides = array<i32>} : memref<36x384xbf16, #tpu.memory_space<vmem>>, vector<4x384xbf16>,
    %c0_29 = arith.constant 0 : index
    %c0_30 = arith.constant 0 : index
    %27 = vector.load %arg4[%c0_29, %c0_30] : memref<8x36xbf16, #tpu.memory_space<vmem>>, vector<8x36xbf16>
    %c0_31 = arith.constant 0 : index
    %c0_32 = arith.constant 0 : index
    %28 = vector.load %arg7[%c0_31, %c0_32] : memref<36x384xbf16, #tpu.memory_space<vmem>>, vector<36x384xbf16>
    %cst = arith.constant dense<0.000000e+00> : vector<8x384xf32>
    %29 = tpu.matmul %27, %28, %cst {dimension_numbers = #tpu.dot_dimension_numbers<[1], [0], [0], [1], [0, 0, 1, 1], [], []>} : vector<8x36xbf16>, vector<36x384xbf16>, vector<8x384xf32> -> vector<8x384xf32>
    %c0_33 = arith.constant 0 : index
    %c0_34 = arith.constant 0 : index
    %30 = vector.load %arg5[%c0_33, %c0_34] : memref<8x1xf32, #tpu.memory_space<vmem>>, vector<8x1xf32>
    %31 = vector.broadcast %30 : vector<8x1xf32> to vector<8x384xf32>
    %32 = arith.addf %29, %31 : vector<8x384xf32>
    %cst_35 = arith.constant 0.000000e+00 : f32
    %33 = vector.broadcast %cst_35 : f32 to vector<8x384xf32>
    %34 = arith.maximumf %32, %33 : vector<8x384xf32>
    %c0_36 = arith.constant 0 : index
    %c0_37 = arith.constant 0 : index
    %c0_38 = arith.constant 0 : index
    %35 = vector.load %arg6[%c0_36, %c0_37, %c0_38] : memref<1x8x384xf32, #tpu.memory_space<vmem>>, vector<1x8x384xf32>
    %36 = vector.shape_cast %35 : vector<1x8x384xf32> to vector<8x384xf32>
    %37 = vector.shape_cast %34 : vector<8x384xf32> to vector<1x8x384xf32>
    tpu.vector_store %arg6[%c0_36, %c0_37, %c0_38], %37 {strides = array<i32>} : memref<1x8x384xf32, #tpu.memory_space<vmem>>, vector<1x8x384xf32>,
    return
  }
  func.func @transform_0(%arg0: i32, %arg1: i32, %arg2: i32) -> (i32, i32, i32) {
    %c0_i32 = arith.constant 0 : i32
    %c0_i32_0 = arith.constant 0 : i32
    %c0_i32_1 = arith.constant 0 : i32
    return %arg0, %c0_i32, %c0_i32_0 : i32, i32, i32
  }
  func.func @transform_1(%arg0: i32, %arg1: i32, %arg2: i32) -> (i32, i32) {
    %c0_i32 = arith.constant 0 : i32
    %c0_i32_0 = arith.constant 0 : i32
    return %arg1, %c0_i32 : i32, i32
  }
  func.func @transform_2(%arg0: i32, %arg1: i32, %arg2: i32) -> (i32, i32) {
    %c0_i32 = arith.constant 0 : i32
    %c0_i32_0 = arith.constant 0 : i32
    return %arg1, %c0_i32 : i32, i32
  }
  func.func @transform_3(%arg0: i32, %arg1: i32, %arg2: i32) -> (i32, i32, i32) {
    %c0_i32 = arith.constant 0 : i32
    return %arg0, %arg1, %arg2 : i32, i32, i32
  }
}

</mosaic_0001>

<llo_original>
// kernel: tpu_custom_call.1
$region0: #{tpu_custom_call.1}
  #allocation0 [shape = 'u32[]', space=smem, size = 0x4, offset = 0x4, fixed_abs, tag = 'smem constant byte address 0x4 - core index']
  #allocation1 [shape = 'u32[144,128]{1,0:T(1,128)}', space=vmem, size = 0x12000, scoped, tag = 'internal scratch']
  #allocation2 [shape = 'bf16[36,384]{1,0:T(8,128)(2,1)}', space=vmem, size = 0x7800, scoped, tag = 'scratch operand']
  %s0 = inlined_call_operand.hbm [shape: bf16[2,4,432], index: 0, kind: input, shape index: {}]
  %s1 = inlined_call_operand.vmem [shape: bf16[8,36], index: 1, kind: input, shape index: {}]
  %s2 = inlined_call_operand.vmem [shape: f32[8,1], index: 2, kind: input, shape index: {}]
  %s3 = inlined_call_operand.hbm [shape: f32[2,8,384], index: 3, kind: output, shape index: {}]
  %s4 = sld [smem:[#allocation0]]
  $region49: #{tpu_custom_call.1} parent=0
    _
  %s6 = ssub.s32 1, %s4
  %s7 = scalar_select 0, %s6, %s4
  $region1: #{tpu_custom_call.1} parent=0
    #allocation3 [shape = 'u8[8192]{0}', space=vmem, size = 0x2000, scoped, tag = 'input window, operand 0']
    #allocation4 [shape = 's32[2]{0}', space=sflag, size = 0x8, scoped, tag = 'scoped memory for tpu_custom_call.1']
    #allocation5 [shape = 's32[2]{0}', space=sflag, size = 0x8, scoped, tag = 'scoped memory for tpu_custom_call.1']
    #allocation6 [shape = 'u8[24576]{0}', space=vmem, size = 0x6000, scoped, tag = 'output window, operand 0']
    %8 = vsyncpa [#allocation4], 0
    %s9 = scalar_lea.sflag [#allocation4], 1
    %10 = vsyncpa %s9, 0
    %11 = vsyncpa [#allocation5], 0
    %s12 = scalar_lea.sflag [#allocation5], 1
    %13 = vsyncpa %s12, 0
    loop: start=0, step=1, limit=4
    $region2: #{tpu_custom_call.1} parent=1 // loop_pre_header
      _
    $region3: #{tpu_custom_call.1} parent=1 // loop_header
      %s15 = sphi 0, %s19
      %p16 = scmp.ge.s32.totalorder %s15, 4
      %s22 = sphi 0, %s41
      %s23 = sphi 0, %s37
      %s24 = sphi 0, %s33
      %s25 = sphi 0, %s22
      %s26 = sphi 0, %s23
      %s27 = sphi 0, %s24
      %s28 = sphi 0, %s25
      %s29 = sphi 0, %s26
      %s30 = sphi 0, %s27
      %s44 = sphi 0, %s46
      %s47 = sphi 0, %s44
      %s48 = sphi 0, %s47
      %s64 = sphi 0, %s48
      %s70 = sphi 0, %s72
      %s73 = sphi 0, %s70
      %s74 = sphi 0, %s73
      %s90 = sphi 0, %s74
      %s96 = sphi 0, %s98
      %s99 = sphi 0, %s96
      %s100 = sphi 0, %s99
      %s116 = sphi 0, %s100
      %s126 = sphi 0, %s128
      %s129 = sphi 0, %s126
      %s130 = sphi 0, %s129
      %s146 = sphi 0, %s130
    $region4: #{tpu_custom_call.1} parent=1 // loop_header_branch
      %18 = sbr.rel (%p16) target = $region8
    $region5: #{tpu_custom_call.1} parent=1 // loop_body
      %s20 = ssub.s32 %s15, 1
      %s21 = ssub.s32 %s15, 2
      %s31 = sadd.s32 1, %s24
      %p32 = scmp.ge.s32.totalorder %s31, 1
      %s33 = scalar_select %p32, 0, %s31
      %s34 = sadd.s32 1, %s23
      %s35 = scalar_select %p32, %s34, %s23
      %p36 = scmp.ge.s32.totalorder %s35, 1
      %s37 = scalar_select %p36, 0, %s35
      %s38 = sadd.s32 1, %s22
      %s39 = scalar_select %p36, %s38, %s22
      %p40 = scmp.ge.s32.totalorder %s39, 2
      %s41 = scalar_select %p40, 0, %s39
      %s42 = ssub.s32 %s22, %s41
      %p43 = scmp.eq.s32.totalorder %s42, 0
      %s45 = sadd.s32 %s44, 1
      %s46 = scalar_select %p43, %s44, %s45
      %p49 = pneg %p43
      %p50 = scmp.eq.s32.totalorder %s15, 1
      %p51 = por %p49, %p50
      %p52 = scmp.ne.s32.totalorder %s44, %s47
      %p53 = scmp.eq.s32.totalorder %s15, 0
      %p54 = por %p52, %p53
      %p55 = scmp.ne.s32.totalorder %s44, %s47
      %p56 = scmp.eq.s32.totalorder %s20, 1
      %p57 = por %p55, %p56
      %p58 = scmp.ne.s32.totalorder %s47, %s48
      %p59 = scmp.eq.s32.totalorder %s20, 0
      %p60 = por %p58, %p59
      %p61 = scmp.ne.s32.totalorder %s47, %s48
      %p62 = scmp.eq.s32.totalorder %s21, 1
      %p63 = por %p61, %p62
      %p65 = scmp.ne.s32.totalorder %s48, %s64
      %p66 = scmp.eq.s32.totalorder %s21, 0
      %p67 = por %p65, %p66
      %s68 = ssub.s32 %s23, %s37
      %p69 = scmp.eq.s32.totalorder %s68, 0
      %s71 = sadd.s32 %s70, 1
      %s72 = scalar_select %p69, %s70, %s71
      %p75 = pneg %p69
      %p76 = scmp.eq.s32.totalorder %s15, 1
      %p77 = por %p75, %p76
      %p78 = scmp.ne.s32.totalorder %s70, %s73
      %p79 = scmp.eq.s32.totalorder %s15, 0
      %p80 = por %p78, %p79
      %p81 = scmp.ne.s32.totalorder %s70, %s73
      %p82 = scmp.eq.s32.totalorder %s20, 1
      %p83 = por %p81, %p82
      %p84 = scmp.ne.s32.totalorder %s73, %s74
      %p85 = scmp.eq.s32.totalorder %s20, 0
      %p86 = por %p84, %p85
      %p87 = scmp.ne.s32.totalorder %s73, %s74
      %p88 = scmp.eq.s32.totalorder %s21, 1
      %p89 = por %p87, %p88
      %p91 = scmp.ne.s32.totalorder %s74, %s90
      %p92 = scmp.eq.s32.totalorder %s21, 0
      %p93 = por %p91, %p92
      %s94 = ssub.s32 %s23, %s37
      %p95 = scmp.eq.s32.totalorder %s94, 0
      %s97 = sadd.s32 %s96, 1
      %s98 = scalar_select %p95, %s96, %s97
      %p101 = pneg %p95
      %p102 = scmp.eq.s32.totalorder %s15, 1
      %p103 = por %p101, %p102
      %p104 = scmp.ne.s32.totalorder %s96, %s99
      %p105 = scmp.eq.s32.totalorder %s15, 0
      %p106 = por %p104, %p105
      %p107 = scmp.ne.s32.totalorder %s96, %s99
      %p108 = scmp.eq.s32.totalorder %s20, 1
      %p109 = por %p107, %p108
      %p110 = scmp.ne.s32.totalorder %s99, %s100
      %p111 = scmp.eq.s32.totalorder %s20, 0
      %p112 = por %p110, %p111
      %p113 = scmp.ne.s32.totalorder %s99, %s100
      %p114 = scmp.eq.s32.totalorder %s21, 1
      %p115 = por %p113, %p114
      %p117 = scmp.ne.s32.totalorder %s100, %s116
      %p118 = scmp.eq.s32.totalorder %s21, 0
      %p119 = por %p117, %p118
      %s120 = ssub.s32 %s22, %s41
      %s121 = ssub.s32 %s23, %s37
      %s122 = sor.u32 %s120, %s121
      %s123 = ssub.s32 %s24, %s33
      %s124 = sor.u32 %s122, %s123
      %p125 = scmp.eq.s32.totalorder %s124, 0
      %s127 = sadd.s32 %s126, 1
      %s128 = scalar_select %p125, %s126, %s127
      %p131 = pneg %p125
      %p132 = scmp.eq.s32.totalorder %s15, 1
      %p133 = por %p131, %p132
      %p134 = scmp.ne.s32.totalorder %s126, %s129
      %p135 = scmp.eq.s32.totalorder %s15, 0
      %p136 = por %p134, %p135
      %p137 = scmp.ne.s32.totalorder %s126, %s129
      %p138 = scmp.eq.s32.totalorder %s20, 1
      %p139 = por %p137, %p138
      %p140 = scmp.ne.s32.totalorder %s129, %s130
      %p141 = scmp.eq.s32.totalorder %s20, 0
      %p142 = por %p140, %p141
      %p143 = scmp.ne.s32.totalorder %s129, %s130
      %p144 = scmp.eq.s32.totalorder %s21, 1
      %p145 = por %p143, %p144
      %p147 = scmp.ne.s32.totalorder %s130, %s146
      %p148 = scmp.eq.s32.totalorder %s21, 0
      %p149 = por %p147, %p148
      %p150 = scmp.le.s32.totalorder 1, %s15
      %p151 = scmp.lt.s32.totalorder %s15, 3
      %p152 = pnand %p150, %p151
      %p153 = pneg %p152
      // Predicated region
      $region9: #{tpu_custom_call.1} parent=5 // pred_check
        _
      $region10: #{tpu_custom_call.1} parent=5 // pred_check_branch
        %155 = sbr.rel (%p152) target = $region12
      $region11: #{tpu_custom_call.1} parent=5 // pred_region
        %s156 = ssub.s32 %s15, 1
        // Predicated region
        $region13: #{tpu_custom_call.1} parent=11 // pred_check
          %p157 = pneg %p86
        $region14: #{tpu_custom_call.1} parent=11 // pred_check_branch
          %159 = sbr.rel (%p157) target = $region16
        $region15: #{tpu_custom_call.1} parent=11 // pred_region
          %p160 = scmp.lt.s32.totalorder %s26, 0
          %s161 = scalar_select %p160, %s26, 0
          %s162 = smul.addr %s161, 4
          %s163 = scalar_lea.vmem %s1, %s162
        $region16: #{tpu_custom_call.1} parent=11 // pred_fallthru
          _
        // Predicated region
        $region17: #{tpu_custom_call.1} parent=11 // pred_check
          %p164 = pneg %p112
        $region18: #{tpu_custom_call.1} parent=11 // pred_check_branch
          %166 = sbr.rel (%p164) target = $region20
        $region19: #{tpu_custom_call.1} parent=11 // pred_region
          %p167 = scmp.lt.s32.totalorder %s26, 0
          %s168 = scalar_select %p167, %s26, 0
          %s169 = smul.addr %s168, 8
          %s170 = scalar_lea.vmem %s2, %s169
        $region20: #{tpu_custom_call.1} parent=11 // pred_fallthru
          _
      $region12: #{tpu_custom_call.1} parent=5 // pred_fallthru
        _
      %p171 = scmp.lt.s32.totalorder %s15, 2
      // Predicated region
      $region21: #{tpu_custom_call.1} parent=5 // pred_check
        %p172 = pneg %p171
      $region22: #{tpu_custom_call.1} parent=5 // pred_check_branch
        %174 = sbr.rel (%p172) target = $region24
      $region23: #{tpu_custom_call.1} parent=5 // pred_region
        // Predicated region
        $region25: #{tpu_custom_call.1} parent=23 // pred_check
          %p175 = pneg %p54
        $region26: #{tpu_custom_call.1} parent=23 // pred_check_branch
          %177 = sbr.rel (%p175) target = $region28
        $region27: #{tpu_custom_call.1} parent=23 // pred_region
          %s178 = sand.u32 %s44, 1
          %s179 = scalar_lea.sflag [#allocation4], %s178
          %s180 = sand.u32 %s44, 1
          %s181 = smul.addr %s180, 8
          %s182 = scalar_lea.vmem [#allocation3], %s181
          %s184 = ssub.s32 128, 128
          %185 = vsyncadd %s179, %s184
          %s186 = smul.addr %s22, 4
          %s187 = smul.addr %s186, 32
          %s188 = scalar_lea.hbm %s0, %s187
          %s190 = sshll.u32 %s182, 4
          %s191 = int_to_ptr.vmem [resolvable:$true] %s190
          %193 = dma.hbm_to_vmem [thread:$0]  %s188, 128, %s191, %s179
        $region28: #{tpu_custom_call.1} parent=23 // pred_fallthru
          _
      $region24: #{tpu_custom_call.1} parent=5 // pred_fallthru
        _
      %p194 = scmp.le.s32.totalorder 1, %s15
      %p195 = scmp.lt.s32.totalorder %s15, 3
      %p196 = pnand %p194, %p195
      %p197 = pneg %p196
      // Predicated region
      $region29: #{tpu_custom_call.1} parent=5 // pred_check
        _
      $region30: #{tpu_custom_call.1} parent=5 // pred_check_branch
        %199 = sbr.rel (%p196) target = $region32
      $region31: #{tpu_custom_call.1} parent=5 // pred_region
        %s200 = ssub.s32 %s15, 1
        %s201 = sand.u32 %s47, 1
        %s202 = scalar_lea.sflag [#allocation4], %s201
        %s203 = sand.u32 %s47, 1
        %s204 = smul.addr %s203, 8
        %s205 = scalar_lea.vmem [#allocation3], %s204
        // Predicated region
        $region33: #{tpu_custom_call.1} parent=31 // pred_check
          %p206 = pneg %p60
        $region34: #{tpu_custom_call.1} parent=31 // pred_check_branch
          %208 = sbr.rel (%p206) target = $region36
        $region35: #{tpu_custom_call.1} parent=31 // pred_region
          %209 = dma.done %s202, 128
        $region36: #{tpu_custom_call.1} parent=31 // pred_fallthru
          _
        %s210 = sand.u32 %s47, 1
        %s211 = scalar_lea.sflag [#allocation4], %s210
        %s212 = sand.u32 %s47, 1
        %s213 = smul.addr %s212, 8
        %s214 = scalar_lea.vmem [#allocation3], %s213
        %p215 = pneg %p60
        %p216 = pneg %p57
        %p217 = scmp.lt.s32.totalorder %s26, 0
        %s218 = scalar_select %p217, %s26, 0
        %s219 = smul.addr %s218, 4
        %s220 = scalar_lea.vmem %s1, %s219
        %p221 = pneg %p86
        %p222 = pneg %p83
        %p223 = scmp.lt.s32.totalorder %s26, 0
        %s224 = scalar_select %p223, %s26, 0
        %s225 = smul.addr %s224, 8
        %s226 = scalar_lea.vmem %s2, %s225
        %p227 = pneg %p112
        %p228 = pneg %p109
        %p229 = pneg %p142
        %p230 = pneg %p139
        %s231 = sand.u32 %s129, 1
        %s232 = scalar_lea.sflag [#allocation5], %s231
        %s233 = sand.u32 %s129, 1
        %s234 = smul.addr %s233, 24
        %s235 = scalar_lea.vmem [#allocation6], %s234
        %p236 = scmp.lt.s32.totalorder %s26, 0
        %s237 = scalar_select %p236, %s26, 0
        %s238 = smul.addr %s237, 4
        %s239 = scalar_lea.vmem %s1, %s238
        %p240 = scmp.lt.s32.totalorder %s26, 0
        %s241 = scalar_select %p240, %s26, 0
        %s242 = smul.addr %s241, 8
        %s243 = scalar_lea.vmem %s2, %s242
        %s244 = smul.u32 3, %s27
        %v246 = vld [vmem:[%s205] sm:$0x3f]
        %v248 = vcombine.high %v246, %v246
        %v250 = vunpack.c.l.s4 1983009808
        %v251 = vunpack.c.0.s8 %v250
        %v252 = vlaneseq
        %v253 = vshrl.u32 %v252, 7
        %v254 = vsub.s32 %v251, %v253
        %v255 = vrot.slane %v246, %v254
        %v257 = vunpack.c.l.s4 1983009808
        %v258 = vunpack.c.0.s8 %v257
        %v259 = vlaneseq
        %v260 = vshrl.u32 %v259, 7
        %v261 = vsub.s32 %v258, %v260
        %v262 = vrot.slane %v248, %v261
        %265 = vst [vmem:[#allocation2] sm:$0x33] %v255
        %266 = vst [vmem:[#allocation2 + $0x8] sm:$0x3] %v262
        %v267 = vld [vmem:[%s205] sm:$0xff]
        %v269 = vcombine.low %v267, %v267
        %v271 = vunpack.c.l.s4 1983009808
        %v272 = vunpack.c.0.s8 %v271
        %v273 = vlaneseq
        %v274 = vshrl.u32 %v273, 7
        %v275 = vsub.s32 %v272, %v274
        %v276 = vrot.slane %v269, %v275
        %v278 = vunpack.c.l.s4 1983009808
        %v279 = vunpack.c.0.s8 %v278
        %v280 = vlaneseq
        %v281 = vshrl.u32 %v280, 7
        %v282 = vsub.s32 %v279, %v281
        %v283 = vrot.slane %v267, %v282
        %284 = vrot.lane.b32.xlu0 %v276, 127
        %v285 = vpop.permute.xlu0 %284
        %286 = vrot.lane.b32.xlu0 %v283, 127
        %v287 = vpop.permute.xlu0 %286
        %v288 = vrot.slane %v285, 4
        %v289 = vrot.slane %v287, 4
        %vm290 = vcmask 1043456
        %v291 = vsel %vm290, %v288, %v289
        %vm292 = vcmask 1039360
        %v293 = vsel %vm292, %v285, %v291
        %v294 = vsel %vm292, %v287, %v289
        %297 = vst [vmem:[#allocation2] sm:$0xcc] %v293
        %298 = vst [vmem:[#allocation2 + $0x8] sm:$0xc] %v294
        %v299 = vld [vmem:[%s205] sm:$0xff]
        %v301 = vcombine.high %v299, %v299
        %v303 = vunpack.c.l.s4 1983009808
        %v304 = vunpack.c.0.s8 %v303
        %v305 = vlaneseq
        %v306 = vshrl.u32 %v305, 7
        %v307 = vsub.s32 %v304, %v306
        %v308 = vrot.slane %v299, %v307
        %v310 = vunpack.c.l.s4 1983009808
        %v311 = vunpack.c.0.s8 %v310
        %v312 = vlaneseq
        %v313 = vshrl.u32 %v312, 7
        %v314 = vsub.s32 %v311, %v313
        %v315 = vrot.slane %v301, %v314
        %316 = vrot.lane.b32.xlu0 %v308, 126
        %v317 = vpop.permute.xlu0 %316
        %318 = vrot.lane.b32.xlu0 %v315, 126
        %v319 = vpop.permute.xlu0 %318
        %v320 = vrot.slane %v317, 4
        %v321 = vrot.slane %v319, 4
        %v322 = vsel %vm290, %v320, %v321
        %vm323 = vcmask 1031168
        %v324 = vsel %vm323, %v317, %v322
        %v325 = vsel %vm323, %v319, %v321
        %328 = vst [vmem:[#allocation2 + $0xc] sm:$0x33] %v324
        %329 = vst [vmem:[#allocation2 + $0x14] sm:$0x3] %v325
        %v330 = vld [vmem:[%s205] sm:$0xff]
        %v332 = vcombine.low %v330, %v330
        %v334 = vunpack.c.l.s4 1983009808
        %v335 = vunpack.c.0.s8 %v334
        %v336 = vlaneseq
        %v337 = vshrl.u32 %v336, 7
        %v338 = vsub.s32 %v335, %v337
        %v339 = vrot.slane %v332, %v338
        %v341 = vunpack.c.l.s4 1983009808
        %v342 = vunpack.c.0.s8 %v341
        %v343 = vlaneseq
        %v344 = vshrl.u32 %v343, 7
        %v345 = vsub.s32 %v342, %v344
        %v346 = vrot.slane %v330, %v345
        %347 = vrot.lane.b32.xlu0 %v339, 110
        %v348 = vpop.permute.xlu0 %347
        %349 = vrot.lane.b32.xlu0 %v346, 110
        %v350 = vpop.permute.xlu0 %349
        %v351 = vrot.slane %v348, 4
        %v352 = vrot.slane %v350, 4
        %v353 = vsel %vm290, %v351, %v352
        %vm354 = vcmask 900096
        %v355 = vsel %vm354, %v348, %v353
        %v356 = vsel %vm354, %v350, %v352
        %359 = vst [vmem:[#allocation2 + $0xc] sm:$0xcc] %v355
        %360 = vst [vmem:[#allocation2 + $0x14] sm:$0xc] %v356
        %v361 = vld [vmem:[%s205] sm:$0xff]
        %v363 = vcombine.high %v361, %v361
        %v365 = vunpack.c.l.s4 1983009808
        %v366 = vunpack.c.0.s8 %v365
        %v367 = vlaneseq
        %v368 = vshrl.u32 %v367, 7
        %v369 = vsub.s32 %v366, %v368
        %v370 = vrot.slane %v361, %v369
        %v372 = vunpack.c.l.s4 1983009808
        %v373 = vunpack.c.0.s8 %v372
        %v374 = vlaneseq
        %v375 = vshrl.u32 %v374, 7
        %v376 = vsub.s32 %v373, %v375
        %v377 = vrot.slane %v363, %v376
        %378 = vrot.lane.b32.xlu0 %v370, 109
        %v379 = vpop.permute.xlu0 %378
        %380 = vrot.lane.b32.xlu0 %v377, 109
        %v381 = vpop.permute.xlu0 %380
        %v382 = vrot.slane %v379, 4
        %v383 = vrot.slane %v381, 4
        %v384 = vsel %vm290, %v382, %v383
        %vm385 = vcmask 891904
        %v386 = vsel %vm385, %v379, %v384
        %v387 = vsel %vm385, %v381, %v383
        %390 = vst [vmem:[#allocation2 + $0x18] sm:$0x33] %v386
        %391 = vst [vmem:[#allocation2 + $0x20] sm:$0x3] %v387
        %v392 = vld [vmem:[%s205] sm:$0xff]
        %v394 = vcombine.low %v392, %v392
        %v396 = vunpack.c.l.s4 1983009808
        %v397 = vunpack.c.0.s8 %v396
        %v398 = vlaneseq
        %v399 = vshrl.u32 %v398, 7
        %v400 = vsub.s32 %v397, %v399
        %v401 = vrot.slane %v394, %v400
        %v403 = vunpack.c.l.s4 1983009808
        %v404 = vunpack.c.0.s8 %v403
        %v405 = vlaneseq
        %v406 = vshrl.u32 %v405, 7
        %v407 = vsub.s32 %v404, %v406
        %v408 = vrot.slane %v392, %v407
        %409 = vrot.lane.b32.xlu0 %v401, 108
        %v410 = vpop.permute.xlu0 %409
        %411 = vrot.lane.b32.xlu0 %v408, 108
        %v412 = vpop.permute.xlu0 %411
        %v413 = vrot.slane %v410, 4
        %v414 = vrot.slane %v412, 4
        %v415 = vsel %vm290, %v413, %v414
        %vm416 = vcmask 883712
        %v417 = vsel %vm416, %v410, %v415
        %v418 = vsel %vm416, %v412, %v414
        %421 = vst [vmem:[#allocation2 + $0x18] sm:$0xcc] %v417
        %422 = vst [vmem:[#allocation2 + $0x20] sm:$0xc] %v418
        %v423 = vld [vmem:[%s205] sm:$0xff]
        %v425 = vcombine.high %v423, %v423
        %v427 = vunpack.c.l.s4 1983009808
        %v428 = vunpack.c.0.s8 %v427
        %v429 = vlaneseq
        %v430 = vshrl.u32 %v429, 7
        %v431 = vsub.s32 %v428, %v430
        %v432 = vrot.slane %v423, %v431
        %v434 = vunpack.c.l.s4 1983009808
        %v435 = vunpack.c.0.s8 %v434
        %v436 = vlaneseq
        %v437 = vshrl.u32 %v436, 7
        %v438 = vsub.s32 %v435, %v437
        %v439 = vrot.slane %v425, %v438
        %440 = vrot.lane.b32.xlu0 %v432, 92
        %v441 = vpop.permute.xlu0 %440
        %442 = vrot.lane.b32.xlu0 %v439, 92
        %v443 = vpop.permute.xlu0 %442
        %v444 = vrot.slane %v441, 4
        %v445 = vrot.slane %v443, 4
        %v446 = vsel %vm290, %v444, %v445
        %vm447 = vcmask 752640
        %v448 = vsel %vm447, %v441, %v446
        %v449 = vsel %vm447, %v443, %v445
        %452 = vst [vmem:[#allocation2 + $0x24] sm:$0x33] %v448
        %453 = vst [vmem:[#allocation2 + $0x2c] sm:$0x3] %v449
        %v454 = vld [vmem:[%s205] sm:$0xff]
        %v456 = vcombine.low %v454, %v454
        %v458 = vunpack.c.l.s4 1983009808
        %v459 = vunpack.c.0.s8 %v458
        %v460 = vlaneseq
        %v461 = vshrl.u32 %v460, 7
        %v462 = vsub.s32 %v459, %v461
        %v463 = vrot.slane %v456, %v462
        %v465 = vunpack.c.l.s4 1983009808
        %v466 = vunpack.c.0.s8 %v465
        %v467 = vlaneseq
        %v468 = vshrl.u32 %v467, 7
        %v469 = vsub.s32 %v466, %v468
        %v470 = vrot.slane %v454, %v469
        %471 = vrot.lane.b32.xlu0 %v463, 91
        %v472 = vpop.permute.xlu0 %471
        %473 = vrot.lane.b32.xlu0 %v470, 91
        %v474 = vpop.permute.xlu0 %473
        %v475 = vrot.slane %v472, 4
        %v476 = vrot.slane %v474, 4
        %v477 = vsel %vm290, %v475, %v476
        %vm478 = vcmask 744448
        %v479 = vsel %vm478, %v472, %v477
        %v480 = vsel %vm478, %v474, %v476
        %483 = vst [vmem:[#allocation2 + $0x24] sm:$0xcc] %v479
        %484 = vst [vmem:[#allocation2 + $0x2c] sm:$0xc] %v480
        %v485 = vld [vmem:[%s205] sm:$0xff]
        %v487 = vcombine.high %v485, %v485
        %v489 = vunpack.c.l.s4 1983009808
        %v490 = vunpack.c.0.s8 %v489
        %v491 = vlaneseq
        %v492 = vshrl.u32 %v491, 7
        %v493 = vsub.s32 %v490, %v492
        %v494 = vrot.slane %v485, %v493
        %v496 = vunpack.c.l.s4 1983009808
        %v497 = vunpack.c.0.s8 %v496
        %v498 = vlaneseq
        %v499 = vshrl.u32 %v498, 7
        %v500 = vsub.s32 %v497, %v499
        %v501 = vrot.slane %v487, %v500
        %502 = vrot.lane.b32.xlu0 %v494, 90
        %v503 = vpop.permute.xlu0 %502
        %504 = vrot.lane.b32.xlu0 %v501, 90
        %v505 = vpop.permute.xlu0 %504
        %v506 = vrot.slane %v503, 4
        %v507 = vrot.slane %v505, 4
        %v508 = vsel %vm290, %v506, %v507
        %vm509 = vcmask 736256
        %v510 = vsel %vm509, %v503, %v508
        %v511 = vsel %vm509, %v505, %v507
        %514 = vst [vmem:[#allocation2 + $0x30] sm:$0x33] %v510
        %515 = vst [vmem:[#allocation2 + $0x38] sm:$0x3] %v511
        %v516 = vld [vmem:[%s239] sm:$0xf]
        %v517 = vld [vmem:[#allocation2] sm:$0xff]
        %v518 = vld [vmem:[#allocation2 + $0x8] sm:$0xf]
        %v519 = vld [vmem:[#allocation2 + $0xc] sm:$0xff]
        %v520 = vld [vmem:[#allocation2 + $0x14] sm:$0xf]
        %v521 = vld [vmem:[#allocation2 + $0x18] sm:$0xff]
        %v522 = vld [vmem:[#allocation2 + $0x20] sm:$0xf]
        %v523 = vld [vmem:[#allocation2 + $0x24] sm:$0xff]
        %v524 = vld [vmem:[#allocation2 + $0x2c] sm:$0xf]
        %v525 = vld [vmem:[#allocation2 + $0x30] sm:$0x33]
        %v526 = vld [vmem:[#allocation2 + $0x38] sm:$0x3]
        %v527 = vld [vmem:[%s243] sm:$0xff]
        %529 = vset.pattern.permute.xlu0 0
        %530 = vperm.xlu0 %529, %v527
        %v531 = vpop.permute.xlu0 %530
        %v543 = vunpack.c.l.b16 %v517
        %v544 = vunpack.c.h.b16 %v517
        %v545 = vunpack.c.l.b16 %v518
        %v546 = vunpack.c.l.b16 %v519
        %v547 = vunpack.c.h.b16 %v519
        %v548 = vunpack.c.l.b16 %v520
        %v549 = vunpack.c.l.b16 %v521
        %v550 = vunpack.c.h.b16 %v521
        %v551 = vunpack.c.l.b16 %v522
        %v552 = vunpack.c.l.b16 %v523
        %v553 = vunpack.c.h.b16 %v523
        %v554 = vunpack.c.l.b16 %v524
        %v555 = vunpack.c.l.b16 %v525
        %v556 = vunpack.c.h.b16 %v525
        %v557 = vunpack.c.l.b16 %v526
        %v558 = vpack.c.b16 %v546, %v543
        %v559 = vpack.c.b16 %v547, %v544
        %v560 = vpack.c.b16 %v548, %v545
        %v561 = vpack.c.b16 %v552, %v549
        %v562 = vpack.c.b16 %v553, %v550
        %v563 = vpack.c.b16 %v554, %v551
        %v564 = vpack.c.b16 %v555, %v555
        %v565 = vpack.c.b16 %v556, %v556
        %v566 = vpack.c.b16 %v557, %v557
        %vm573 = vcmask 293888
        %v575 = vsel %vm573, %v516, 0
        %vm577 = vcmask 1041408
        %v579 = vsel %vm577, %v564, 0
        %v582 = vsel %vm577, %v565, 0
        %v585 = vsel %vm577, %v566, 0
        %587 = vmatprep.subr.bf16.mxu0 %v559
        %588 = vmatpush1.bf16.msra.mxu0 %v558
        %589 = vmatprep.subr.bf16.mxu0 %v562
        %590 = vmatpush1.bf16.msra.mxu0 %v561
        %591 = vmatprep.subr.bf16.mxu0 %v582
        %592 = vmatpush1.bf16.msra.mxu0 %v579
        %593 = vmatprep.subr.bf16.mxu0 0
        %594 = vmatpush1.bf16.msra.mxu0 0
        %595 = vmatprep.subr.bf16.mxu0 0
        %596 = vmatpush1.bf16.msra.mxu0 0
        %597 = vmatprep.subr.bf16.mxu0 0
        %598 = vmatpush1.bf16.msra.mxu0 0
        %599 = vmatprep.subr.bf16.mxu0 0
        %600 = vmatpush1.bf16.msra.mxu0 0
        %601 = vmatprep.subr.bf16.mxu0 0
        %602 = vmatpush1.bf16.msra.mxu0 0
        %603 = vmatprep.subr.bf16.mxu0 0
        %604 = vmatpush1.bf16.msra.mxu0 0
        %605 = vmatprep.subr.bf16.mxu0 0
        %606 = vmatpush1.bf16.msra.mxu0 0
        %607 = vmatprep.subr.bf16.mxu0 0
        %608 = vmatpush1.bf16.msra.mxu0 0
        %609 = vmatprep.subr.bf16.mxu0 0
        %610 = vmatpush1.bf16.msra.mxu0 0
        %611 = vmatprep.subr.bf16.mxu0 0
        %612 = vmatpush1.bf16.msra.mxu0 0
        %613 = vmatprep.subr.bf16.mxu0 0
        %614 = vmatpush1.bf16.msra.mxu0 0
        %615 = vmatprep.subr.bf16.mxu0 0
        %616 = vmatpush1.bf16.msra.mxu0 0
        %617 = vmatprep.subr.bf16.mxu0 0
        %618 = vmatpush1.bf16.msra.mxu0 0
        %619 = vmatprep.mubr.bf16.mxu0 0
        %620 = vmatmul.mubr.bf16.gmra.mrb[0].mxu0 %v575
        %v621 = vpop.f32.mrb[0].mxu0
        %v622 = vadd.f32 %v531, %v621
        %v623 = vpop.f32.mrb[0].mxu0
        %v624 = vadd.f32 %v531, %v623
        %v625 = vpop.f32.mrb[0].mxu0
        %v626 = vpop.f32.mrb[0].mxu0
        %627 = vdwg.mxu0
        %628 = vmatprep.subr.bf16.mxu0 0
        %629 = vmatpush1.bf16.msra.mxu0 %v560
        %630 = vmatprep.subr.bf16.mxu0 0
        %631 = vmatpush1.bf16.msra.mxu0 %v563
        %632 = vmatprep.subr.bf16.mxu0 0
        %633 = vmatpush1.bf16.msra.mxu0 %v585
        %634 = vmatprep.subr.bf16.mxu0 0
        %635 = vmatpush1.bf16.msra.mxu0 0
        %636 = vmatprep.subr.bf16.mxu0 0
        %637 = vmatpush1.bf16.msra.mxu0 0
        %638 = vmatprep.subr.bf16.mxu0 0
        %639 = vmatpush1.bf16.msra.mxu0 0
        %640 = vmatprep.subr.bf16.mxu0 0
        %641 = vmatpush1.bf16.msra.mxu0 0
        %642 = vmatprep.subr.bf16.mxu0 0
        %643 = vmatpush1.bf16.msra.mxu0 0
        %644 = vmatprep.subr.bf16.mxu0 0
        %645 = vmatpush1.bf16.msra.mxu0 0
        %646 = vmatprep.subr.bf16.mxu0 0
        %647 = vmatpush1.bf16.msra.mxu0 0
        %648 = vmatprep.subr.bf16.mxu0 0
        %649 = vmatpush1.bf16.msra.mxu0 0
        %650 = vmatprep.subr.bf16.mxu0 0
        %651 = vmatpush1.bf16.msra.mxu0 0
        %652 = vmatprep.subr.bf16.mxu0 0
        %653 = vmatpush1.bf16.msra.mxu0 0
        %654 = vmatprep.subr.bf16.mxu0 0
        %655 = vmatpush1.bf16.msra.mxu0 0
        %656 = vmatprep.subr.bf16.mxu0 0
        %657 = vmatpush1.bf16.msra.mxu0 0
        %658 = vmatprep.subr.bf16.mxu0 0
        %659 = vmatpush1.bf16.msra.mxu0 0
        %660 = vmatprep.mubr.bf16.mxu0 0
        %661 = vmatmul.mubr.bf16.gmra.mrb[0].mxu0 %v575
        %v662 = vpop.f32.mrb[0].mxu0
        %v663 = vadd.f32 %v531, %v662
        %v664 = vpop.f32.mrb[0].mxu0
        %v665 = vpop.f32.mrb[0].mxu0
        %v666 = vpop.f32.mrb[0].mxu0
        %667 = vdwg.mxu0
        %v668 = vmax.f32 %v622, 0.0
        %v669 = vmax.f32 %v624, 0.0
        %v670 = vmax.f32 %v663, 0.0
        %671 = vst [vmem:[%s235] sm:$0xff] %v668
        %672 = vst [vmem:[%s235 + $0x8] sm:$0xff] %v669
        %673 = vst [vmem:[%s235 + $0x10] sm:$0xff] %v670
        %s674 = sand.u32 %s129, 1
        %s675 = scalar_lea.sflag [#allocation5], %s674
        %s676 = sand.u32 %s129, 1
        %s677 = smul.addr %s676, 24
        %s678 = scalar_lea.vmem [#allocation6], %s677
        // Predicated region
        $region37: #{tpu_custom_call.1} parent=31 // pred_check
          %p679 = pneg %p139
        $region38: #{tpu_custom_call.1} parent=31 // pred_check_branch
          %681 = sbr.rel (%p679) target = $region40
        $region39: #{tpu_custom_call.1} parent=31 // pred_region
          %s682 = smul.u32 3, %s27
          %s684 = ssub.s32 384, 384
          %685 = vsyncadd %s675, %s684
          %s686 = smul.addr %s26, 3
          %s687 = sadd.s32 %s682, %s686
          %s688 = smul.addr %s25, 3
          %s689 = sadd.s32 %s687, %s688
          %s690 = smul.addr %s689, 128
          %s691 = scalar_lea.hbm %s3, %s690
          %s693 = sshll.u32 %s678, 4
          %s694 = int_to_ptr.vmem [resolvable:$true] %s693
          %696 = dma.vmem_to_hbm [thread:$0]  %s694, 384, %s691, %s675
        $region40: #{tpu_custom_call.1} parent=31 // pred_fallthru
          _
      $region32: #{tpu_custom_call.1} parent=5 // pred_fallthru
        _
      %p697 = scmp.le.s32.totalorder 2, %s15
      // Predicated region
      $region41: #{tpu_custom_call.1} parent=5 // pred_check
        %p698 = pneg %p697
      $region42: #{tpu_custom_call.1} parent=5 // pred_check_branch
        %700 = sbr.rel (%p698) target = $region44
      $region43: #{tpu_custom_call.1} parent=5 // pred_region
        %s701 = ssub.s32 %s15, 2
        // Predicated region
        $region45: #{tpu_custom_call.1} parent=43 // pred_check
          %p702 = pneg %p145
        $region46: #{tpu_custom_call.1} parent=43 // pred_check_branch
          %704 = sbr.rel (%p702) target = $region48
        $region47: #{tpu_custom_call.1} parent=43 // pred_region
          %s705 = sand.u32 %s130, 1
          %s706 = scalar_lea.sflag [#allocation5], %s705
          %s707 = sand.u32 %s130, 1
          %s708 = smul.addr %s707, 24
          %s709 = scalar_lea.vmem [#allocation6], %s708
          %710 = dma.done %s706, 384
        $region48: #{tpu_custom_call.1} parent=43 // pred_fallthru
          _
      $region44: #{tpu_custom_call.1} parent=5 // pred_fallthru
        _
    $region6: #{tpu_custom_call.1} parent=1 // loop_footer
      %s19 = sadd.s32 1, %s15
    $region7: #{tpu_custom_call.1} parent=1 // loop_footer_branch
      %14 = sbr.rel target = $region3
    $region8: #{tpu_custom_call.1} parent=1 // loop_exit
      _
    %711 = vsyncpa [#allocation4], 1
    %s712 = scalar_lea.sflag [#allocation4], 1
    %713 = vsyncpa %s712, 1
    %714 = vsyncpa [#allocation5], 1
    %s715 = scalar_lea.sflag [#allocation5], 1
    %716 = vsyncpa %s715, 1

</llo_original>
